<compile_context>
chip_gen: v7x
topology: tpu7x:2x2x1
jax: 0.10.0
libtpu: 0.0.40
codegen_flags: <defaults>
</compile_context>

<pallas_src>
import functools

import jax
import jax.numpy as jnp
from jax.experimental import pallas as pl
from jax.experimental.pallas import tpu as pltpu


def _round_up(x: int, m: int) -> int:
    return ((x + m - 1) // m) * m


def _ece_kernel(probs_ref, labels_ref, out_ref, *, is_logit: bool,
                n_bins: int, n_total: int):
    i = pl.program_id(1)                        # row-tile (reduction) axis

    @pl.when(i == 0)
    def _init():
        out_ref[...] = jnp.zeros_like(out_ref)

    x = probs_ref[...].astype(jnp.float32)      # (TN, C), cast per tile
    tn, c = x.shape

    # global row ids of this *logical* tile -> valid mask for ragged /
    # overhanging tiles (probs is NOT padded in HBM).
    tile = pl.program_id(0) * pl.num_programs(1) + i
    row_ids = tile * tn + jax.lax.broadcasted_iota(jnp.int32, (tn, 1), 0)
    valid = row_ids < n_total                   # (TN, 1) bool

    # confidences, predictions = torch.max(softmax(x) if is_logit else x, 1)
    row_max = jnp.max(x, axis=-1, keepdims=True)
    if is_logit:
        # softmax is monotone -> argmax on raw logits;
        # max softmax prob = exp(0) / sum(exp(x - max)) = 1 / sum(exp(x - max))
        denom = jnp.sum(jnp.exp(x - row_max), axis=-1, keepdims=True)
        conf = pl.reciprocal(denom, approx=False)   # exact: binning depends on it
    else:
        conf = row_max
    # ragged-tail rows hold garbage (can be inf/NaN) -> zero their confidence
    conf = jnp.where(valid, conf, 0.0)

    # first-index argmax (matches torch.max / jnp.argmax tie-breaking)
    cls_idx = jax.lax.broadcasted_iota(jnp.int32, (tn, c), 1)
    pred = jnp.min(jnp.where(x == row_max, cls_idx, c), axis=-1, keepdims=True)
    correct = (pred == labels_ref[...]).astype(jnp.float32)    # (TN, 1)

    # bin membership via a single bin index + one-hot compare:
    #   bin_k = (k/n_bins, (k+1)/n_bins]  ->  k = ceil(conf * n_bins) - 1
    bin_idx = jnp.ceil(conf * jnp.float32(n_bins)).astype(jnp.int32) - 1
    bin_idx = jnp.minimum(bin_idx, n_bins - 1)
    in_range = jnp.logical_and(valid,
                               jnp.logical_and(conf > 0.0, conf <= 1.0))
    bin_idx = jnp.where(in_range, bin_idx, n_bins)             # "no bin"
    bins = jax.lax.broadcasted_iota(jnp.int32, (1, n_bins), 1)
    in_bin = (bin_idx == bins).astype(jnp.float32)             # (TN, n_bins)

    # accumulate partial sums directly into the (1, 3, n_bins) output block,
    # which stays VMEM-resident across the "arbitrary" row-tile axis.
    out_ref[:, 0:1, :] += jnp.sum(in_bin, axis=0, keepdims=True)[None]
    out_ref[:, 1:2, :] += jnp.sum(in_bin * conf, axis=0, keepdims=True)[None]
    out_ref[:, 2:3, :] += jnp.sum(in_bin * correct, axis=0, keepdims=True)[None]


def ece_loss(probs, labels, n_bins: int = 15, is_logit: bool = False,
             max_block_rows: int = 2048,
             block_budget_bytes: int = 2 * 1024 * 1024):
    """Pallas implementation of ECELoss.forward.

    probs:  (N, C) float array (probabilities, or logits if is_logit=True)
    labels: (N,) or (N, 1) int array of true class labels
    returns: shape-(1,) float32 array (matching torch.zeros(1) accumulator)
    """
    probs = jnp.asarray(probs)
    if probs.dtype not in (jnp.float32, jnp.bfloat16, jnp.float16):
        probs = probs.astype(jnp.float32)
    n, c = probs.shape
    itemsize = jnp.dtype(probs.dtype).itemsize
    sublane = max(8, 32 // itemsize)            # 8 (f32), 16 (bf16/f16)

    # row tile: target ~block_budget_bytes per native-dtype streamed buffer
    tn = block_budget_bytes // max(1, c * itemsize)
    tn = max(sublane, min(tn, max_block_rows, _round_up(n, sublane)))
    tn = _round_up(tn, sublane)

    total_tiles = pl.cdiv(n, tn)
    # v7x has 2 TensorCores: leading 'parallel' axis splits the row tiles.
    n_split = 2 if total_tiles >= 2 else 1
    tps = pl.cdiv(total_tiles, n_split)         # row tiles per split

    # only the tiny labels array is padded (never the (N, C) probs)
    labels1d = jnp.asarray(labels, jnp.int32).reshape(-1)
    labels2d = jnp.pad(labels1d, (0, total_tiles * tn - n),
                       constant_values=-1).reshape(total_tiles * tn, 1)

    def row_block(s, i):
        # clamp so overhanging tiles of an uneven split re-read a valid block;
        # their rows are masked out in-kernel by the global-row valid mask.
        return (jnp.minimum(s * tps + i, total_tiles - 1), 0)

    kernel = functools.partial(_ece_kernel, is_logit=is_logit,
                               n_bins=n_bins, n_total=n)

    cost = pl.CostEstimate(
        flops=8 * n * c + 8 * n * n_bins,
        transcendentals=(n * c) if is_logit else 0,
        bytes_accessed=n * c * itemsize + 4 * n + n_split * 3 * n_bins * 4,
    )

    parts = pl.pallas_call(
        kernel,
        out_shape=jax.ShapeDtypeStruct((n_split, 3, n_bins), jnp.float32),
        grid=(n_split, tps),
        in_specs=[
            pl.BlockSpec((tn, c), row_block),
            pl.BlockSpec((tn, 1), row_block),
        ],
        out_specs=pl.BlockSpec((1, 3, n_bins), lambda s, i: (s, 0, 0)),
        compiler_params=pltpu.CompilerParams(
            dimension_semantics=("parallel", "arbitrary"),
            vmem_limit_bytes=48 * 1024 * 1024),
        cost_estimate=cost,
    )(probs, labels2d)

    # tiny O(n_bins) epilogue in plain JAX: combine per-core partial sums.
    counts = jnp.sum(parts[:, 0, :], axis=0)
    sconf = jnp.sum(parts[:, 1, :], axis=0)
    scorr = jnp.sum(parts[:, 2, :], axis=0)
    nonempty = counts > 0.0
    safe = jnp.where(nonempty, counts, 1.0)
    gaps = jnp.where(nonempty,
                     jnp.abs(sconf / safe - scorr / safe) * (counts / n), 0.0)
    return jnp.sum(gaps).reshape(1)


def _ece_reference(probs, labels, n_bins=15, is_logit=False):
    """Pure-JAX reference mirroring the PyTorch loop."""
    probs = jnp.asarray(probs, jnp.float32)
    labels = jnp.asarray(labels, jnp.int32).reshape(-1)
    if is_logit:
        probs = jax.nn.softmax(probs, axis=-1)
    conf = jnp.max(probs, axis=1)
    pred = jnp.argmax(probs, axis=1)
    correct = (pred == labels).astype(jnp.float32)
    bounds = jnp.linspace(0.0, 1.0, n_bins + 1)
    ece = 0.0
    for i in range(n_bins):
        in_bin = (conf > bounds[i]) & (conf <= bounds[i + 1])
        prop = jnp.mean(in_bin.astype(jnp.float32))
        cnt = jnp.sum(in_bin.astype(jnp.float32))
        acc = jnp.where(cnt > 0, jnp.sum(correct * in_bin) / jnp.maximum(cnt, 1.0), 0.0)
        avg = jnp.where(cnt > 0, jnp.sum(conf * in_bin) / jnp.maximum(cnt, 1.0), 0.0)
        ece = ece + jnp.where(cnt > 0, jnp.abs(avg - acc) * prop, 0.0)
    return jnp.array([ece], jnp.float32)


if __name__ == "__main__":
    key = jax.random.PRNGKey(0)
    k1, k2, k3, k4, k5, k6 = jax.random.split(key, 6)

    # Test 1: logits path, f32, single row tile (grid (1, 1)).
    N1, C1 = 64, 8
    logits = jax.random.normal(k1, (N1, C1), dtype=jnp.float32) * 2.0
    labels1 = jax.random.randint(k2, (N1,), 0, C1, dtype=jnp.int32)
    ece1 = ece_loss(logits, labels1, n_bins=15, is_logit=True)
    jax.block_until_ready(ece1)
    ref1 = _ece_reference(logits, labels1, n_bins=15, is_logit=True)
    assert jnp.allclose(ece1, ref1, atol=1e-5), (ece1, ref1)

    # Test 2: probability path, ragged N, small tiles -> 4 tiles over a 2x2
    # (parallel, arbitrary) grid; exercises the 2-TC split + tail masking.
    N2, C2 = 61, 16
    raw = jax.random.uniform(k3, (N2, C2), dtype=jnp.float32) + 0.1
    probs2 = raw / jnp.sum(raw, axis=-1, keepdims=True)
    labels2 = jax.random.randint(k4, (N2,), 0, C2, dtype=jnp.int32)
    ece2 = ece_loss(probs2, labels2, n_bins=15, is_logit=False, max_block_rows=16)
    jax.block_until_ready(ece2)
    ref2 = _ece_reference(probs2, labels2, n_bins=15, is_logit=False)
    assert jnp.allclose(ece2, ref2, atol=1e-5), (ece2, ref2)

    # Test 3: native bf16 logits (no wrapper upcast), uneven split (5 tiles on
    # a 2x3 grid) exercising the clamped overhanging tile + ragged last tile.
    N3, C3 = 150, 24
    logits3 = (jax.random.normal(k5, (N3, C3), dtype=jnp.float32) * 3.0
               ).astype(jnp.bfloat16)
    labels3 = jax.random.randint(k6, (N3,), 0, C3, dtype=jnp.int32)
    ece3 = ece_loss(logits3, labels3, n_bins=15, is_logit=True, max_block_rows=32)
    jax.block_until_ready(ece3)
    ref3 = _ece_reference(logits3, labels3, n_bins=15, is_logit=True)
    assert jnp.allclose(ece3, ref3, atol=1e-5), (ece3, ref3)

    print("KERNEL_OK")
</pallas_src>

<mosaic_0001>
module attributes {stable_mosaic.version = 11 : i64} {
  func.func @_ece_kernel(%arg0: i32, %arg1: i32, %arg2: memref<64x8xf32, #tpu.memory_space<vmem>>, %arg3: memref<64x1xi32, #tpu.memory_space<vmem>>, %arg4: memref<1x3x15xf32, #tpu.memory_space<vmem>>) attributes {dimension_semantics = [#tpu.dimension_semantics<parallel>, #tpu.dimension_semantics<arbitrary>], iteration_bounds = array<i64: 1, 1>, scalar_prefetch = 0 : i64, scratch_operands = 0 : i64, tpu.core_type = #tpu.core_type<tc>, window_params = [{transform_indices = @transform_0, window_bounds = array<i64: 64, 8>}, {transform_indices = @transform_1, window_bounds = array<i64: 64, 1>}, {transform_indices = @transform_2, window_bounds = array<i64: 1, 3, 15>}]} {
    %c0_i32 = arith.constant 0 : i32
    %0 = arith.cmpi eq, %arg1, %c0_i32 : i32
    %1 = arith.extui %0 : i1 to i32
    %c0_i32_0 = arith.constant 0 : i32
    %2 = arith.cmpi ne, %1, %c0_i32_0 : i32
    scf.if %2 {
      %cst_31 = arith.constant 0.000000e+00 : f32
      %77 = vector.broadcast %cst_31 : f32 to vector<1x3x15xf32>
      %c0_32 = arith.constant 0 : index
      %c0_33 = arith.constant 0 : index
      %c0_34 = arith.constant 0 : index
      %78 = vector.load %arg4[%c0_32, %c0_33, %c0_34] : memref<1x3x15xf32, #tpu.memory_space<vmem>>, vector<1x3x15xf32>
      tpu.vector_store %arg4[%c0_32, %c0_33, %c0_34], %77 {strides = array<i32>} : memref<1x3x15xf32, #tpu.memory_space<vmem>>, vector<1x3x15xf32>,
    } else {
    }
    %c0 = arith.constant 0 : index
    %c0_1 = arith.constant 0 : index
    %3 = vector.load %arg2[%c0, %c0_1] : memref<64x8xf32, #tpu.memory_space<vmem>>, vector<64x8xf32>
    %c1_i32 = arith.constant 1 : i32
    %4 = arith.muli %arg0, %c1_i32 : i32
    %5 = arith.addi %4, %arg1 : i32
    %c64_i32 = arith.constant 64 : i32
    %6 = arith.muli %5, %c64_i32 : i32
    %7 = tpu.iota {dimensions = array<i32: 0>} : vector<64x1xi32>
    %8 = vector.broadcast %6 : i32 to vector<64x1xi32>
    %9 = arith.addi %8, %7 : vector<64x1xi32>
    %c64_i32_2 = arith.constant 64 : i32
    %10 = vector.broadcast %c64_i32_2 : i32 to vector<64x1xi32>
    %11 = arith.cmpi slt, %9, %10 : vector<64x1xi32>
    %cst = arith.constant dense<0xFF800000> : vector<64xf32>
    %12 = vector.multi_reduction <maximumf>, %3, %cst [1] : vector<64x8xf32> to vector<64xf32>
    %13 = vector.shape_cast %12 : vector<64xf32> to vector<64x1xf32>
    %14 = vector.broadcast %13 : vector<64x1xf32> to vector<64x8xf32>
    %15 = arith.subf %3, %14 : vector<64x8xf32>
    %16 = math.exp %15 : vector<64x8xf32>
    %cst_3 = arith.constant dense<0.000000e+00> : vector<64xf32>
    %17 = vector.multi_reduction <add>, %16, %cst_3 [1] : vector<64x8xf32> to vector<64xf32>
    %18 = vector.shape_cast %17 : vector<64xf32> to vector<64x1xf32>
    %19 = tpu.reciprocal %18 : vector<64x1xf32> -> vector<64x1xf32>
    %cst_4 = arith.constant 0.000000e+00 : f32
    %20 = vector.broadcast %cst_4 : f32 to vector<64x1xf32>
    %21 = arith.select %11, %19, %20 : vector<64x1xi1>, vector<64x1xf32>
    %22 = tpu.iota {dimensions = array<i32: 1>} : vector<64x8xi32>
    %23 = vector.broadcast %13 : vector<64x1xf32> to vector<64x8xf32>
    %24 = arith.cmpf oeq, %3, %23 : vector<64x8xf32>
    %c8_i32 = arith.constant 8 : i32
    %25 = vector.broadcast %c8_i32 : i32 to vector<64x8xi32>
    %26 = arith.select %24, %22, %25 : vector<64x8xi1>, vector<64x8xi32>
    %cst_5 = arith.constant dense<2147483647> : vector<64xi32>
    %27 = vector.multi_reduction <minsi>, %26, %cst_5 [1] : vector<64x8xi32> to vector<64xi32>
    %28 = vector.shape_cast %27 : vector<64xi32> to vector<64x1xi32>
    %c0_6 = arith.constant 0 : index
    %c0_7 = arith.constant 0 : index
    %29 = vector.load %arg3[%c0_6, %c0_7] : memref<64x1xi32, #tpu.memory_space<vmem>>, vector<64x1xi32>
    %30 = arith.cmpi eq, %28, %29 : vector<64x1xi32>
    %31 = arith.extui %30 : vector<64x1xi1> to vector<64x1xi32>
    %32 = arith.sitofp %31 : vector<64x1xi32> to vector<64x1xf32>
    %cst_8 = arith.constant 1.500000e+01 : f32
    %33 = vector.broadcast %cst_8 : f32 to vector<64x1xf32>
    %34 = arith.mulf %21, %33 : vector<64x1xf32>
    %35 = math.ceil %34 : vector<64x1xf32>
    %36 = arith.fptosi %35 : vector<64x1xf32> to vector<64x1xi32>
    %c1_i32_9 = arith.constant 1 : i32
    %37 = vector.broadcast %c1_i32_9 : i32 to vector<64x1xi32>
    %38 = arith.subi %36, %37 : vector<64x1xi32>
    %c14_i32 = arith.constant 14 : i32
    %39 = vector.broadcast %c14_i32 : i32 to vector<64x1xi32>
    %40 = arith.minsi %38, %39 : vector<64x1xi32>
    %cst_10 = arith.constant 0.000000e+00 : f32
    %41 = vector.broadcast %cst_10 : f32 to vector<64x1xf32>
    %42 = arith.cmpf ogt, %21, %41 : vector<64x1xf32>
    %cst_11 = arith.constant 1.000000e+00 : f32
    %43 = vector.broadcast %cst_11 : f32 to vector<64x1xf32>
    %44 = arith.cmpf ole, %21, %43 : vector<64x1xf32>
    %45 = arith.andi %42, %44 : vector<64x1xi1>
    %46 = arith.andi %11, %45 : vector<64x1xi1>
    %c15_i32 = arith.constant 15 : i32
    %47 = vector.broadcast %c15_i32 : i32 to vector<64x1xi32>
    %48 = arith.select %46, %40, %47 : vector<64x1xi1>, vector<64x1xi32>
    %49 = tpu.iota {dimensions = array<i32: 1>} : vector<1x15xi32>
    %50 = vector.broadcast %48 : vector<64x1xi32> to vector<64x15xi32>
    %51 = vector.broadcast %49 : vector<1x15xi32> to vector<64x15xi32>
    %52 = arith.cmpi eq, %50, %51 : vector<64x15xi32>
    %53 = arith.extui %52 : vector<64x15xi1> to vector<64x15xi32>
    %54 = arith.sitofp %53 : vector<64x15xi32> to vector<64x15xf32>
    %c0_12 = arith.constant 0 : index
    %c0_13 = arith.constant 0 : index
    %c0_14 = arith.constant 0 : index
    %55 = vector.load %arg4[%c0_12, %c0_13, %c0_14] : memref<1x3x15xf32, #tpu.memory_space<vmem>>, vector<1x1x15xf32>
    %cst_15 = arith.constant dense<0.000000e+00> : vector<15xf32>
    %56 = vector.multi_reduction <add>, %54, %cst_15 [0] : vector<64x15xf32> to vector<15xf32>
    %57 = vector.shape_cast %56 : vector<15xf32> to vector<1x15xf32>
    %58 = vector.shape_cast %57 : vector<1x15xf32> to vector<1x1x15xf32>
    %59 = arith.addf %55, %58 : vector<1x1x15xf32>
    %c0_16 = arith.constant 0 : index
    %c0_17 = arith.constant 0 : index
    %c0_18 = arith.constant 0 : index
    %60 = vector.load %arg4[%c0_16, %c0_17, %c0_18] : memref<1x3x15xf32, #tpu.memory_space<vmem>>, vector<1x1x15xf32>
    tpu.vector_store %arg4[%c0_16, %c0_17, %c0_18], %59 {strides = array<i32>} : memref<1x3x15xf32, #tpu.memory_space<vmem>>, vector<1x1x15xf32>,
    %c0_19 = arith.constant 0 : index
    %c1 = arith.constant 1 : index
    %c0_20 = arith.constant 0 : index
    %61 = vector.load %arg4[%c0_19, %c1, %c0_20] : memref<1x3x15xf32, #tpu.memory_space<vmem>>, vector<1x1x15xf32>
    %62 = vector.broadcast %21 : vector<64x1xf32> to vector<64x15xf32>
    %63 = arith.mulf %54, %62 : vector<64x15xf32>
    %cst_21 = arith.constant dense<0.000000e+00> : vector<15xf32>
    %64 = vector.multi_reduction <add>, %63, %cst_21 [0] : vector<64x15xf32> to vector<15xf32>
    %65 = vector.shape_cast %64 : vector<15xf32> to vector<1x15xf32>
    %66 = vector.shape_cast %65 : vector<1x15xf32> to vector<1x1x15xf32>
    %67 = arith.addf %61, %66 : vector<1x1x15xf32>
    %c0_22 = arith.constant 0 : index
    %c1_23 = arith.constant 1 : index
    %c0_24 = arith.constant 0 : index
    %68 = vector.load %arg4[%c0_22, %c1_23, %c0_24] : memref<1x3x15xf32, #tpu.memory_space<vmem>>, vector<1x1x15xf32>
    tpu.vector_store %arg4[%c0_22, %c1_23, %c0_24], %67 {strides = array<i32>} : memref<1x3x15xf32, #tpu.memory_space<vmem>>, vector<1x1x15xf32>,
    %c0_25 = arith.constant 0 : index
    %c2 = arith.constant 2 : index
    %c0_26 = arith.constant 0 : index
    %69 = vector.load %arg4[%c0_25, %c2, %c0_26] : memref<1x3x15xf32, #tpu.memory_space<vmem>>, vector<1x1x15xf32>
    %70 = vector.broadcast %32 : vector<64x1xf32> to vector<64x15xf32>
    %71 = arith.mulf %54, %70 : vector<64x15xf32>
    %cst_27 = arith.constant dense<0.000000e+00> : vector<15xf32>
    %72 = vector.multi_reduction <add>, %71, %cst_27 [0] : vector<64x15xf32> to vector<15xf32>
    %73 = vector.shape_cast %72 : vector<15xf32> to vector<1x15xf32>
    %74 = vector.shape_cast %73 : vector<1x15xf32> to vector<1x1x15xf32>
    %75 = arith.addf %69, %74 : vector<1x1x15xf32>
    %c0_28 = arith.constant 0 : index
    %c2_29 = arith.constant 2 : index
    %c0_30 = arith.constant 0 : index
    %76 = vector.load %arg4[%c0_28, %c2_29, %c0_30] : memref<1x3x15xf32, #tpu.memory_space<vmem>>, vector<1x1x15xf32>
    tpu.vector_store %arg4[%c0_28, %c2_29, %c0_30], %75 {strides = array<i32>} : memref<1x3x15xf32, #tpu.memory_space<vmem>>, vector<1x1x15xf32>,
    return
  }
  func.func @transform_0(%arg0: i32, %arg1: i32) -> (i32, i32) {
    %c1_i32 = arith.constant 1 : i32
    %0 = arith.muli %arg0, %c1_i32 : i32
    %1 = arith.addi %0, %arg1 : i32
    %c0_i32 = arith.constant 0 : i32
    %2 = arith.minsi %1, %c0_i32 : i32
    %c0_i32_0 = arith.constant 0 : i32
    %c0_i32_1 = arith.constant 0 : i32
    return %2, %c0_i32_0 : i32, i32
  }
  func.func @transform_1(%arg0: i32, %arg1: i32) -> (i32, i32) {
    %c1_i32 = arith.constant 1 : i32
    %0 = arith.muli %arg0, %c1_i32 : i32
    %1 = arith.addi %0, %arg1 : i32
    %c0_i32 = arith.constant 0 : i32
    %2 = arith.minsi %1, %c0_i32 : i32
    %c0_i32_0 = arith.constant 0 : i32
    %c0_i32_1 = arith.constant 0 : i32
    return %2, %c0_i32_0 : i32, i32
  }
  func.func @transform_2(%arg0: i32, %arg1: i32) -> (i32, i32, i32) {
    %c0_i32 = arith.constant 0 : i32
    %c0_i32_0 = arith.constant 0 : i32
    %c0_i32_1 = arith.constant 0 : i32
    return %arg0, %c0_i32, %c0_i32_0 : i32, i32, i32
  }
}

</mosaic_0001>

<llo_original>
// kernel: tpu_custom_call.1
$region0: #{tpu_custom_call.1}
  #allocation0 [shape = 'u32[]', space=smem, size = 0x4, offset = 0x4, fixed_abs, tag = 'smem constant byte address 0x4 - core index']
  #allocation1 [shape = 'u32[144,128]{1,0:T(1,128)}', space=vmem, size = 0x12000, scoped, tag = 'internal scratch']
  %s0 = inlined_call_operand.vmem [shape: f32[64,8], index: 0, kind: input, shape index: {}]
  %s1 = inlined_call_operand.vmem [shape: s32[64,1], index: 1, kind: input, shape index: {}]
  %s2 = inlined_call_operand.vmem [shape: f32[1,3,15], index: 2, kind: output, shape index: {}]
  %s3 = sld [smem:[#allocation0]]
  $region22: #{tpu_custom_call.1} parent=0
    _
  %s5 = ssub.s32 1, %s3
  %s6 = scalar_select 0, %s5, %s3
  // Predicated region
  $region2: #{tpu_custom_call.1} parent=0 // pred_check
    _
  $region3: #{tpu_custom_call.1} parent=0 // pred_check_branch
    %8 = sbr.rel (0) target = $region5
  $region4: #{tpu_custom_call.1} parent=0 // pred_region
    %s9 = sadd.s32 0, 0
    %p10 = scmp.lt.s32.totalorder %s9, 0
    %s11 = scalar_select %p10, %s9, 0
    %s12 = smul.u32 8, %s11
    %p13 = scmp.lt.s32.totalorder %s12, 7
    %s14 = scalar_select %p13, %s12, 7
    %s15 = smul.addr %s14, 8
    %s16 = scalar_lea.vmem %s0, %s15
    %s17 = sadd.s32 0, 0
    %p18 = scmp.lt.s32.totalorder %s17, 0
    %s19 = scalar_select %p18, %s17, 0
    %s20 = smul.u32 8, %s19
  $region5: #{tpu_custom_call.1} parent=0 // pred_fallthru
    _
  // Predicated region
  $region6: #{tpu_custom_call.1} parent=0 // pred_check
    _
  $region7: #{tpu_custom_call.1} parent=0 // pred_check_branch
    %22 = sbr.rel (0) target = $region9
  $region8: #{tpu_custom_call.1} parent=0 // pred_region
    %s23 = sadd.s32 0, 0
    %p24 = scmp.lt.s32.totalorder %s23, 0
    %s25 = scalar_select %p24, %s23, 0
    %s26 = smul.u32 8, %s25
    %p27 = scmp.lt.s32.totalorder %s26, 7
    %s28 = scalar_select %p27, %s26, 7
    %s29 = smul.addr %s28, 8
    %s30 = scalar_lea.vmem %s1, %s29
    %s31 = sadd.s32 0, 0
    %p32 = scmp.lt.s32.totalorder %s31, 0
    %s33 = scalar_select %p32, %s31, 0
    %s34 = smul.u32 8, %s33
  $region9: #{tpu_custom_call.1} parent=0 // pred_fallthru
    _
  %s35 = sadd.s32 0, 0
  %p36 = scmp.lt.s32.totalorder %s35, 0
  %s37 = scalar_select %p36, %s35, 0
  %s38 = smul.u32 8, %s37
  %p39 = scmp.lt.s32.totalorder %s38, 7
  %s40 = scalar_select %p39, %s38, 7
  %s41 = smul.addr %s40, 8
  %s42 = scalar_lea.vmem %s0, %s41
  %s43 = sadd.s32 0, 0
  %p44 = scmp.lt.s32.totalorder %s43, 0
  %s45 = scalar_select %p44, %s43, 0
  %s46 = smul.u32 8, %s45
  %p47 = scmp.lt.s32.totalorder %s46, 7
  %s48 = scalar_select %p47, %s46, 7
  %s49 = smul.addr %s48, 8
  %s50 = scalar_lea.vmem %s1, %s49
  %s51 = sadd.s32 0, 0
  %p52 = scmp.lt.s32.totalorder %s51, 0
  %s53 = scalar_select %p52, %s51, 0
  %s54 = smul.u32 8, %s53
  %p55 = scmp.lt.s32.totalorder %s54, 7
  %s56 = scalar_select %p55, %s54, 7
  %s57 = smul.addr %s56, 8
  %s58 = scalar_lea.vmem %s0, %s57
  %s59 = sadd.s32 0, 0
  %p60 = scmp.lt.s32.totalorder %s59, 0
  %s61 = scalar_select %p60, %s59, 0
  %s62 = smul.u32 8, %s61
  %s63 = sadd.s32 0, 0
  %p64 = scmp.lt.s32.totalorder %s63, 0
  %s65 = scalar_select %p64, %s63, 0
  %s66 = smul.u32 8, %s65
  %p67 = scmp.lt.s32.totalorder %s66, 7
  %s68 = scalar_select %p67, %s66, 7
  %s69 = smul.addr %s68, 8
  %s70 = scalar_lea.vmem %s1, %s69
  %s71 = sadd.s32 0, 0
  %p72 = scmp.lt.s32.totalorder %s71, 0
  %s73 = scalar_select %p72, %s71, 0
  %s74 = smul.u32 8, %s73
  %p75 = scmp.eq.s32.totalorder 0, 0
  // Predicated region
  $region10: #{tpu_custom_call.1} parent=0 // pred_check
    %p76 = pneg %p75
  $region11: #{tpu_custom_call.1} parent=0 // pred_check_branch
    %78 = sbr.rel (%p76) target = $region13
  $region12: #{tpu_custom_call.1} parent=0 // pred_region
    %vm79 = vcmask 116736
    %80 = vst.msk [vmem:[%s2] sm:$0x7] %vm79, 0.0
  $region13: #{tpu_custom_call.1} parent=0 // pred_fallthru
    _
  %v81 = vld [vmem:[%s58] sm:$0xff]
  %v82 = vld [vmem:[%s58 + $0x8] sm:$0xff]
  %v83 = vld [vmem:[%s58 + $0x10] sm:$0xff]
  %v84 = vld [vmem:[%s58 + $0x18] sm:$0xff]
  %v85 = vld [vmem:[%s58 + $0x20] sm:$0xff]
  %v86 = vld [vmem:[%s58 + $0x28] sm:$0xff]
  %v87 = vld [vmem:[%s58 + $0x30] sm:$0xff]
  %v88 = vld [vmem:[%s58 + $0x38] sm:$0xff]
  %s89 = sadd.s32 0, 0
  %s90 = smul.u32 %s89, 64
  %v91 = vlaneseq
  %v92 = vshrl.u32 %v91, 7
  %v93 = vadd.s32 %v92, 8
  %v94 = vadd.s32 %v92, 16
  %v95 = vadd.s32 %v92, 24
  %v96 = vadd.s32 %v92, 32
  %v97 = vadd.s32 %v92, 40
  %v98 = vadd.s32 %v92, 48
  %v99 = vadd.s32 %v92, 56
  %v100 = vstv %s90
  %v101 = vadd.s32 %v100, %v92
  %v102 = vadd.s32 %v100, %v93
  %v103 = vadd.s32 %v100, %v94
  %v104 = vadd.s32 %v100, %v95
  %v105 = vadd.s32 %v100, %v96
  %v106 = vadd.s32 %v100, %v97
  %v107 = vadd.s32 %v100, %v98
  %v108 = vadd.s32 %v100, %v99
  %vm109 = vcmp.lt.s32.totalorder %v101, 64
  %vm110 = vcmp.lt.s32.totalorder %v102, 64
  %vm111 = vcmp.lt.s32.totalorder %v103, 64
  %vm112 = vcmp.lt.s32.totalorder %v104, 64
  %vm113 = vcmp.lt.s32.totalorder %v105, 64
  %vm114 = vcmp.lt.s32.totalorder %v106, 64
  %vm115 = vcmp.lt.s32.totalorder %v107, 64
  %vm116 = vcmp.lt.s32.totalorder %v108, 64
  %vm117 = vcmask 64512
  %v118 = vsel %vm117, %v81, -inf
  %119 = vmax.xlane.f32.xlu0 %v118
  %v120 = vpop.xlane.xlu0 %119
  %v121 = vsel %vm117, %v82, -inf
  %122 = vmax.xlane.f32.xlu0 %v121
  %v123 = vpop.xlane.xlu0 %122
  %v124 = vsel %vm117, %v83, -inf
  %125 = vmax.xlane.f32.xlu0 %v124
  %v126 = vpop.xlane.xlu0 %125
  %v127 = vsel %vm117, %v84, -inf
  %128 = vmax.xlane.f32.xlu0 %v127
  %v129 = vpop.xlane.xlu0 %128
  %v130 = vsel %vm117, %v85, -inf
  %131 = vmax.xlane.f32.xlu0 %v130
  %v132 = vpop.xlane.xlu0 %131
  %v133 = vsel %vm117, %v86, -inf
  %134 = vmax.xlane.f32.xlu0 %v133
  %v135 = vpop.xlane.xlu0 %134
  %v136 = vsel %vm117, %v87, -inf
  %137 = vmax.xlane.f32.xlu0 %v136
  %v138 = vpop.xlane.xlu0 %137
  %v139 = vsel %vm117, %v88, -inf
  %140 = vmax.xlane.f32.xlu0 %v139
  %v141 = vpop.xlane.xlu0 %140
  %v142 = vsub.f32 %v81, %v120
  %v143 = vsub.f32 %v82, %v123
  %v144 = vsub.f32 %v83, %v126
  %v145 = vsub.f32 %v84, %v129
  %v146 = vsub.f32 %v85, %v132
  %v147 = vsub.f32 %v86, %v135
  %v148 = vsub.f32 %v87, %v138
  %v149 = vsub.f32 %v88, %v141
  %v150 = vmul.f32 %v142, 1.442695
  %v151 = vpow.pop %v150
  %v152 = vmul.f32 %v143, 1.442695
  %v153 = vpow.pop %v152
  %v154 = vmul.f32 %v144, 1.442695
  %v155 = vpow.pop %v154
  %v156 = vmul.f32 %v145, 1.442695
  %v157 = vpow.pop %v156
  %v158 = vmul.f32 %v146, 1.442695
  %v159 = vpow.pop %v158
  %v160 = vmul.f32 %v147, 1.442695
  %v161 = vpow.pop %v160
  %v162 = vmul.f32 %v148, 1.442695
  %v163 = vpow.pop %v162
  %v164 = vmul.f32 %v149, 1.442695
  %v165 = vpow.pop %v164
  %v166 = vsel %vm117, %v151, 0.0
  %167 = vadd.xlane.f32.xlu0 %v166
  %v168 = vpop.xlane.xlu0 %167
  %v169 = vsel %vm117, %v153, 0.0
  %170 = vadd.xlane.f32.xlu0 %v169
  %v171 = vpop.xlane.xlu0 %170
  %v172 = vsel %vm117, %v155, 0.0
  %173 = vadd.xlane.f32.xlu0 %v172
  %v174 = vpop.xlane.xlu0 %173
  %v175 = vsel %vm117, %v157, 0.0
  %176 = vadd.xlane.f32.xlu0 %v175
  %v177 = vpop.xlane.xlu0 %176
  %v178 = vsel %vm117, %v159, 0.0
  %179 = vadd.xlane.f32.xlu0 %v178
  %v180 = vpop.xlane.xlu0 %179
  %v181 = vsel %vm117, %v161, 0.0
  %182 = vadd.xlane.f32.xlu0 %v181
  %v183 = vpop.xlane.xlu0 %182
  %v184 = vsel %vm117, %v163, 0.0
  %185 = vadd.xlane.f32.xlu0 %v184
  %v186 = vpop.xlane.xlu0 %185
  %v187 = vsel %vm117, %v165, 0.0
  %188 = vadd.xlane.f32.xlu0 %v187
  %v189 = vpop.xlane.xlu0 %188
  %v190 = vrcp.pop %v168
  %v191 = vrcp.pop %v171
  %v192 = vrcp.pop %v174
  %v193 = vrcp.pop %v177
  %v194 = vrcp.pop %v180
  %v195 = vrcp.pop %v183
  %v196 = vrcp.pop %v186
  %v197 = vrcp.pop %v189
  %v198 = vsel %vm109, %v190, 0.0
  %v199 = vsel %vm110, %v191, 0.0
  %v200 = vsel %vm111, %v192, 0.0
  %v201 = vsel %vm112, %v193, 0.0
  %v202 = vsel %vm113, %v194, 0.0
  %v203 = vsel %vm114, %v195, 0.0
  %v204 = vsel %vm115, %v196, 0.0
  %v205 = vsel %vm116, %v197, 0.0
  %v206 = vlaneseq
  %v207 = vand.u32 %v206, 127
  %vm208 = vcmp.eq.f32.partialorder %v81, %v120
  %vm209 = vcmp.eq.f32.partialorder %v82, %v123
  %vm210 = vcmp.eq.f32.partialorder %v83, %v126
  %vm211 = vcmp.eq.f32.partialorder %v84, %v129
  %vm212 = vcmp.eq.f32.partialorder %v85, %v132
  %vm213 = vcmp.eq.f32.partialorder %v86, %v135
  %vm214 = vcmp.eq.f32.partialorder %v87, %v138
  %vm215 = vcmp.eq.f32.partialorder %v88, %v141
  %v216 = vsel %vm208, %v207, 8
  %v217 = vsel %vm209, %v207, 8
  %v218 = vsel %vm210, %v207, 8
  %v219 = vsel %vm211, %v207, 8
  %v220 = vsel %vm212, %v207, 8
  %v221 = vsel %vm213, %v207, 8
  %v222 = vsel %vm214, %v207, 8
  %v223 = vsel %vm215, %v207, 8
  %v224 = vsel %vm117, %v216, 2147483647
  %v225 = vand.u32 %v224, 65535
  %v226 = vshra.s32 %v224, 16
  %v227 = vcvt.s32.f32 %v225
  %v228 = vcvt.s32.f32 %v226
  %229 = vmin.xlane.f32.xlu0 %v228
  %v230 = vpop.xlane.xlu0 %229
  %vm231 = vcmp.eq.f32.partialorder %v228, %v230
  %v232 = vsel %vm231, %v227, inf
  %233 = vmin.xlane.f32.xlu0 %v232
  %v234 = vpop.xlane.xlu0 %233
  %v235 = vcvt.f32.s32 %v234
  %v236 = vcvt.f32.s32 %v230
  %v237 = vshll.u32 %v236, 16
  %v238 = vadd.s32 %v237, %v235
  %v239 = vsel %vm117, %v217, 2147483647
  %v240 = vand.u32 %v239, 65535
  %v241 = vshra.s32 %v239, 16
  %v242 = vcvt.s32.f32 %v240
  %v243 = vcvt.s32.f32 %v241
  %244 = vmin.xlane.f32.xlu0 %v243
  %v245 = vpop.xlane.xlu0 %244
  %vm246 = vcmp.eq.f32.partialorder %v243, %v245
  %v247 = vsel %vm246, %v242, inf
  %248 = vmin.xlane.f32.xlu0 %v247
  %v249 = vpop.xlane.xlu0 %248
  %v250 = vcvt.f32.s32 %v249
  %v251 = vcvt.f32.s32 %v245
  %v252 = vshll.u32 %v251, 16
  %v253 = vadd.s32 %v252, %v250
  %v254 = vsel %vm117, %v218, 2147483647
  %v255 = vand.u32 %v254, 65535
  %v256 = vshra.s32 %v254, 16
  %v257 = vcvt.s32.f32 %v255
  %v258 = vcvt.s32.f32 %v256
  %259 = vmin.xlane.f32.xlu0 %v258
  %v260 = vpop.xlane.xlu0 %259
  %vm261 = vcmp.eq.f32.partialorder %v258, %v260
  %v262 = vsel %vm261, %v257, inf
  %263 = vmin.xlane.f32.xlu0 %v262
  %v264 = vpop.xlane.xlu0 %263
  %v265 = vcvt.f32.s32 %v264
  %v266 = vcvt.f32.s32 %v260
  %v267 = vshll.u32 %v266, 16
  %v268 = vadd.s32 %v267, %v265
  %v269 = vsel %vm117, %v219, 2147483647
  %v270 = vand.u32 %v269, 65535
  %v271 = vshra.s32 %v269, 16
  %v272 = vcvt.s32.f32 %v270
  %v273 = vcvt.s32.f32 %v271
  %274 = vmin.xlane.f32.xlu0 %v273
  %v275 = vpop.xlane.xlu0 %274
  %vm276 = vcmp.eq.f32.partialorder %v273, %v275
  %v277 = vsel %vm276, %v272, inf
  %278 = vmin.xlane.f32.xlu0 %v277
  %v279 = vpop.xlane.xlu0 %278
  %v280 = vcvt.f32.s32 %v279
  %v281 = vcvt.f32.s32 %v275
  %v282 = vshll.u32 %v281, 16
  %v283 = vadd.s32 %v282, %v280
  %v284 = vsel %vm117, %v220, 2147483647
  %v285 = vand.u32 %v284, 65535
  %v286 = vshra.s32 %v284, 16
  %v287 = vcvt.s32.f32 %v285
  %v288 = vcvt.s32.f32 %v286
  %289 = vmin.xlane.f32.xlu0 %v288
  %v290 = vpop.xlane.xlu0 %289
  %vm291 = vcmp.eq.f32.partialorder %v288, %v290
  %v292 = vsel %vm291, %v287, inf
  %293 = vmin.xlane.f32.xlu0 %v292
  %v294 = vpop.xlane.xlu0 %293
  %v295 = vcvt.f32.s32 %v294
  %v296 = vcvt.f32.s32 %v290
  %v297 = vshll.u32 %v296, 16
  %v298 = vadd.s32 %v297, %v295
  %v299 = vsel %vm117, %v221, 2147483647
  %v300 = vand.u32 %v299, 65535
  %v301 = vshra.s32 %v299, 16
  %v302 = vcvt.s32.f32 %v300
  %v303 = vcvt.s32.f32 %v301
  %304 = vmin.xlane.f32.xlu0 %v303
  %v305 = vpop.xlane.xlu0 %304
  %vm306 = vcmp.eq.f32.partialorder %v303, %v305
  %v307 = vsel %vm306, %v302, inf
  %308 = vmin.xlane.f32.xlu0 %v307
  %v309 = vpop.xlane.xlu0 %308
  %v310 = vcvt.f32.s32 %v309
  %v311 = vcvt.f32.s32 %v305
  %v312 = vshll.u32 %v311, 16
  %v313 = vadd.s32 %v312, %v310
  %v314 = vsel %vm117, %v222, 2147483647
  %v315 = vand.u32 %v314, 65535
  %v316 = vshra.s32 %v314, 16
  %v317 = vcvt.s32.f32 %v315
  %v318 = vcvt.s32.f32 %v316
  %319 = vmin.xlane.f32.xlu0 %v318
  %v320 = vpop.xlane.xlu0 %319
  %vm321 = vcmp.eq.f32.partialorder %v318, %v320
  %v322 = vsel %vm321, %v317, inf
  %323 = vmin.xlane.f32.xlu0 %v322
  %v324 = vpop.xlane.xlu0 %323
  %v325 = vcvt.f32.s32 %v324
  %v326 = vcvt.f32.s32 %v320
  %v327 = vshll.u32 %v326, 16
  %v328 = vadd.s32 %v327, %v325
  %v329 = vsel %vm117, %v223, 2147483647
  %v330 = vand.u32 %v329, 65535
  %v331 = vshra.s32 %v329, 16
  %v332 = vcvt.s32.f32 %v330
  %v333 = vcvt.s32.f32 %v331
  %334 = vmin.xlane.f32.xlu0 %v333
  %v335 = vpop.xlane.xlu0 %334
  %vm336 = vcmp.eq.f32.partialorder %v333, %v335
  %v337 = vsel %vm336, %v332, inf
  %338 = vmin.xlane.f32.xlu0 %v337
  %v339 = vpop.xlane.xlu0 %338
  %v340 = vcvt.f32.s32 %v339
  %v341 = vcvt.f32.s32 %v335
  %v342 = vshll.u32 %v341, 16
  %v343 = vadd.s32 %v342, %v340
  %v344 = vld [vmem:[%s70] sm:$0xff]
  %v345 = vld [vmem:[%s70 + $0x8] sm:$0xff]
  %v346 = vld [vmem:[%s70 + $0x10] sm:$0xff]
  %v347 = vld [vmem:[%s70 + $0x18] sm:$0xff]
  %v348 = vld [vmem:[%s70 + $0x20] sm:$0xff]
  %v349 = vld [vmem:[%s70 + $0x28] sm:$0xff]
  %v350 = vld [vmem:[%s70 + $0x30] sm:$0xff]
  %v351 = vld [vmem:[%s70 + $0x38] sm:$0xff]
  %vm352 = vcmp.eq.s32.totalorder %v238, %v344
  %vm353 = vcmp.eq.s32.totalorder %v253, %v345
  %vm354 = vcmp.eq.s32.totalorder %v268, %v346
  %vm355 = vcmp.eq.s32.totalorder %v283, %v347
  %vm356 = vcmp.eq.s32.totalorder %v298, %v348
  %vm357 = vcmp.eq.s32.totalorder %v313, %v349
  %vm358 = vcmp.eq.s32.totalorder %v328, %v350
  %vm359 = vcmp.eq.s32.totalorder %v343, %v351
  %v360 = vsel %vm352, 1, 0
  %v361 = vsel %vm353, 1, 0
  %v362 = vsel %vm354, 1, 0
  %v363 = vsel %vm355, 1, 0
  %v364 = vsel %vm356, 1, 0
  %v365 = vsel %vm357, 1, 0
  %v366 = vsel %vm358, 1, 0
  %v367 = vsel %vm359, 1, 0
  %v368 = vcvt.s32.f32 %v360
  %v369 = vcvt.s32.f32 %v361
  %v370 = vcvt.s32.f32 %v362
  %v371 = vcvt.s32.f32 %v363
  %v372 = vcvt.s32.f32 %v364
  %v373 = vcvt.s32.f32 %v365
  %v374 = vcvt.s32.f32 %v366
  %v375 = vcvt.s32.f32 %v367
  %v376 = vmul.f32 %v198, 15.0
  %v377 = vmul.f32 %v199, 15.0
  %v378 = vmul.f32 %v200, 15.0
  %v379 = vmul.f32 %v201, 15.0
  %v380 = vmul.f32 %v202, 15.0
  %v381 = vmul.f32 %v203, 15.0
  %v382 = vmul.f32 %v204, 15.0
  %v383 = vmul.f32 %v205, 15.0
  %v384 = vceil.f32 %v376
  %v385 = vceil.f32 %v377
  %v386 = vceil.f32 %v378
  %v387 = vceil.f32 %v379
  %v388 = vceil.f32 %v380
  %v389 = vceil.f32 %v381
  %v390 = vceil.f32 %v382
  %v391 = vceil.f32 %v383
  %v392 = vcvt.f32.s32.to.zero.pseudo %v384
  %v393 = vcvt.f32.s32.to.zero.pseudo %v385
  %v394 = vcvt.f32.s32.to.zero.pseudo %v386
  %v395 = vcvt.f32.s32.to.zero.pseudo %v387
  %v396 = vcvt.f32.s32.to.zero.pseudo %v388
  %v397 = vcvt.f32.s32.to.zero.pseudo %v389
  %v398 = vcvt.f32.s32.to.zero.pseudo %v390
  %v399 = vcvt.f32.s32.to.zero.pseudo %v391
  %v400 = vsub.s32 %v392, 1
  %v401 = vsub.s32 %v393, 1
  %v402 = vsub.s32 %v394, 1
  %v403 = vsub.s32 %v395, 1
  %v404 = vsub.s32 %v396, 1
  %v405 = vsub.s32 %v397, 1
  %v406 = vsub.s32 %v398, 1
  %v407 = vsub.s32 %v399, 1
  %vm408 = vcmp.lt.s32.totalorder %v400, 14
  %v409 = vsel %vm408, %v400, 14
  %vm410 = vcmp.lt.s32.totalorder %v401, 14
  %v411 = vsel %vm410, %v401, 14
  %vm412 = vcmp.lt.s32.totalorder %v402, 14
  %v413 = vsel %vm412, %v402, 14
  %vm414 = vcmp.lt.s32.totalorder %v403, 14
  %v415 = vsel %vm414, %v403, 14
  %vm416 = vcmp.lt.s32.totalorder %v404, 14
  %v417 = vsel %vm416, %v404, 14
  %vm418 = vcmp.lt.s32.totalorder %v405, 14
  %v419 = vsel %vm418, %v405, 14
  %vm420 = vcmp.lt.s32.totalorder %v406, 14
  %v421 = vsel %vm420, %v406, 14
  %vm422 = vcmp.lt.s32.totalorder %v407, 14
  %v423 = vsel %vm422, %v407, 14
  %vm424 = vcmp.gt.f32.partialorder %v198, 0.0
  %vm425 = vcmp.gt.f32.partialorder %v199, 0.0
  %vm426 = vcmp.gt.f32.partialorder %v200, 0.0
  %vm427 = vcmp.gt.f32.partialorder %v201, 0.0
  %vm428 = vcmp.gt.f32.partialorder %v202, 0.0
  %vm429 = vcmp.gt.f32.partialorder %v203, 0.0
  %vm430 = vcmp.gt.f32.partialorder %v204, 0.0
  %vm431 = vcmp.gt.f32.partialorder %v205, 0.0
  %vm432 = vcmp.le.f32.partialorder %v198, 1.0
  %vm433 = vcmp.le.f32.partialorder %v199, 1.0
  %vm434 = vcmp.le.f32.partialorder %v200, 1.0
  %vm435 = vcmp.le.f32.partialorder %v201, 1.0
  %vm436 = vcmp.le.f32.partialorder %v202, 1.0
  %vm437 = vcmp.le.f32.partialorder %v203, 1.0
  %vm438 = vcmp.le.f32.partialorder %v204, 1.0
  %vm439 = vcmp.le.f32.partialorder %v205, 1.0
  %vm440 = vmand %vm424, %vm432
  %vm441 = vmand %vm425, %vm433
  %vm442 = vmand %vm426, %vm434
  %vm443 = vmand %vm427, %vm435
  %vm444 = vmand %vm428, %vm436
  %vm445 = vmand %vm429, %vm437
  %vm446 = vmand %vm430, %vm438
  %vm447 = vmand %vm431, %vm439
  %vm448 = vmand %vm109, %vm440
  %vm449 = vmand %vm110, %vm441
  %vm450 = vmand %vm111, %vm442
  %vm451 = vmand %vm112, %vm443
  %vm452 = vmand %vm113, %vm444
  %vm453 = vmand %vm114, %vm445
  %vm454 = vmand %vm115, %vm446
  %vm455 = vmand %vm116, %vm447
  %v456 = vsel %vm448, %v409, 15
  %v457 = vsel %vm449, %v411, 15
  %v458 = vsel %vm450, %v413, 15
  %v459 = vsel %vm451, %v415, 15
  %v460 = vsel %vm452, %v417, 15
  %v461 = vsel %vm453, %v419, 15
  %v462 = vsel %vm454, %v421, 15
  %v463 = vsel %vm455, %v423, 15
  %vm464 = vcmp.eq.s32.totalorder %v456, %v207
  %vm465 = vcmp.eq.s32.totalorder %v457, %v207
  %vm466 = vcmp.eq.s32.totalorder %v458, %v207
  %vm467 = vcmp.eq.s32.totalorder %v459, %v207
  %vm468 = vcmp.eq.s32.totalorder %v460, %v207
  %vm469 = vcmp.eq.s32.totalorder %v461, %v207
  %vm470 = vcmp.eq.s32.totalorder %v462, %v207
  %vm471 = vcmp.eq.s32.totalorder %v463, %v207
  %v472 = vsel %vm464, 1, 0
  %v473 = vsel %vm465, 1, 0
  %v474 = vsel %vm466, 1, 0
  %v475 = vsel %vm467, 1, 0
  %v476 = vsel %vm468, 1, 0
  %v477 = vsel %vm469, 1, 0
  %v478 = vsel %vm470, 1, 0
  %v479 = vsel %vm471, 1, 0
  %v480 = vcvt.s32.f32 %v472
  %v481 = vcvt.s32.f32 %v473
  %v482 = vcvt.s32.f32 %v474
  %v483 = vcvt.s32.f32 %v475
  %v484 = vcvt.s32.f32 %v476
  %v485 = vcvt.s32.f32 %v477
  %v486 = vcvt.s32.f32 %v478
  %v487 = vcvt.s32.f32 %v479
  %v488 = vld [vmem:[%s2] sm:$0x1]
  %vm489 = vcmask 121856
  %v490 = vsel %vm489, %v480, 0.0
  %v491 = vsel %vm489, %v481, 0.0
  %v492 = vadd.f32 %v490, %v491
  %v493 = vsel %vm489, %v482, 0.0
  %v494 = vadd.f32 %v492, %v493
  %v495 = vsel %vm489, %v483, 0.0
  %v496 = vadd.f32 %v494, %v495
  %v497 = vsel %vm489, %v484, 0.0
  %v498 = vadd.f32 %v496, %v497
  %v499 = vsel %vm489, %v485, 0.0
  %v500 = vadd.f32 %v498, %v499
  %v501 = vsel %vm489, %v486, 0.0
  %v502 = vadd.f32 %v500, %v501
  %v503 = vsel %vm489, %v487, 0.0
  %v504 = vadd.f32 %v502, %v503
  %v505 = vrot.slane %v504, 4
  %v506 = vadd.f32 %v504, %v505
  %v507 = vrot.slane %v506, 2
  %v508 = vadd.f32 %v506, %v507
  %v509 = vrot.slane %v508, 1
  %v510 = vadd.f32 %v508, %v509
  %v511 = vadd.f32 %v488, %v510
  %vm512 = vcmask 114688
  %513 = vst.msk [vmem:[%s2] sm:$0x1] %vm512, %v511
  %v514 = vld [vmem:[%s2 + $0x1] sm:$0x1]
  %v515 = vmul.f32 %v480, %v198
  %v516 = vmul.f32 %v481, %v199
  %v517 = vmul.f32 %v482, %v200
  %v518 = vmul.f32 %v483, %v201
  %v519 = vmul.f32 %v484, %v202
  %v520 = vmul.f32 %v485, %v203
  %v521 = vmul.f32 %v486, %v204
  %v522 = vmul.f32 %v487, %v205
  %v523 = vsel %vm489, %v515, 0.0
  %v524 = vsel %vm489, %v516, 0.0
  %v525 = vadd.f32 %v523, %v524
  %v526 = vsel %vm489, %v517, 0.0
  %v527 = vadd.f32 %v525, %v526
  %v528 = vsel %vm489, %v518, 0.0
  %v529 = vadd.f32 %v527, %v528
  %v530 = vsel %vm489, %v519, 0.0
  %v531 = vadd.f32 %v529, %v530
  %v532 = vsel %vm489, %v520, 0.0
  %v533 = vadd.f32 %v531, %v532
  %v534 = vsel %vm489, %v521, 0.0
  %v535 = vadd.f32 %v533, %v534
  %v536 = vsel %vm489, %v522, 0.0
  %v537 = vadd.f32 %v535, %v536
  %v538 = vrot.slane %v537, 4
  %v539 = vadd.f32 %v537, %v538
  %v540 = vrot.slane %v539, 2
  %v541 = vadd.f32 %v539, %v540
  %v542 = vrot.slane %v541, 1
  %v543 = vadd.f32 %v541, %v542
  %v544 = vadd.f32 %v514, %v543
  %545 = vst.msk [vmem:[%s2 + $0x1] sm:$0x1] %vm512, %v544
  %v546 = vld [vmem:[%s2 + $0x2] sm:$0x1]
  %548 = vset.pattern.permute.xlu0 0
  %549 = vperm.xlu0 %548, %v368
  %v550 = vpop.permute.xlu0 %549
  %553 = vset.pattern.permute.xlu0 0
  %554 = vperm.xlu0 %553, %v369
  %v555 = vpop.permute.xlu0 %554
  %558 = vset.pattern.permute.xlu0 0
  %559 = vperm.xlu0 %558, %v370
  %v560 = vpop.permute.xlu0 %559
  %563 = vset.pattern.permute.xlu0 0
  %564 = vperm.xlu0 %563, %v371
  %v565 = vpop.permute.xlu0 %564
  %568 = vset.pattern.permute.xlu0 0
  %569 = vperm.xlu0 %568, %v372
  %v570 = vpop.permute.xlu0 %569
  %573 = vset.pattern.permute.xlu0 0
  %574 = vperm.xlu0 %573, %v373
  %v575 = vpop.permute.xlu0 %574
  %578 = vset.pattern.permute.xlu0 0
  %579 = vperm.xlu0 %578, %v374
  %v580 = vpop.permute.xlu0 %579
  %583 = vset.pattern.permute.xlu0 0
  %584 = vperm.xlu0 %583, %v375
  %v585 = vpop.permute.xlu0 %584
  %v587 = vmul.f32 %v480, %v550
  %v588 = vmul.f32 %v481, %v555
  %v589 = vmul.f32 %v482, %v560
  %v590 = vmul.f32 %v483, %v565
  %v591 = vmul.f32 %v484, %v570
  %v592 = vmul.f32 %v485, %v575
  %v593 = vmul.f32 %v486, %v580
  %v594 = vmul.f32 %v487, %v585
  %v595 = vsel %vm489, %v587, 0.0
  %v596 = vsel %vm489, %v588, 0.0
  %v597 = vadd.f32 %v595, %v596
  %v598 = vsel %vm489, %v589, 0.0
  %v599 = vadd.f32 %v597, %v598
  %v600 = vsel %vm489, %v590, 0.0
  %v601 = vadd.f32 %v599, %v600
  %v602 = vsel %vm489, %v591, 0.0
  %v603 = vadd.f32 %v601, %v602
  %v604 = vsel %vm489, %v592, 0.0
  %v605 = vadd.f32 %v603, %v604
  %v606 = vsel %vm489, %v593, 0.0
  %v607 = vadd.f32 %v605, %v606
  %v608 = vsel %vm489, %v594, 0.0
  %v609 = vadd.f32 %v607, %v608
  %v610 = vrot.slane %v609, 4
  %v611 = vadd.f32 %v609, %v610
  %v612 = vrot.slane %v611, 2
  %v613 = vadd.f32 %v611, %v612
  %v614 = vrot.slane %v613, 1
  %v615 = vadd.f32 %v613, %v614
  %v616 = vadd.f32 %v546, %v615
  %617 = vst.msk [vmem:[%s2 + $0x2] sm:$0x1] %vm512, %v616
  // Predicated region
  $region14: #{tpu_custom_call.1} parent=0 // pred_check
    _
  $region15: #{tpu_custom_call.1} parent=0 // pred_check_branch
    %619 = sbr.rel (0) target = $region17
  $region16: #{tpu_custom_call.1} parent=0 // pred_region
    _
  $region17: #{tpu_custom_call.1} parent=0 // pred_fallthru
    _
  // Predicated region
  $region18: #{tpu_custom_call.1} parent=0 // pred_check
    _
  $region19: #{tpu_custom_call.1} parent=0 // pred_check_branch
    %621 = sbr.rel (0) target = $region21
  $region20: #{tpu_custom_call.1} parent=0 // pred_region
    _
  $region21: #{tpu_custom_call.1} parent=0 // pred_fallthru
    _

</llo_original>
